<compile_context>
chip_gen: v7x
topology: tpu7x:2x2x1
jax: 0.10.0
libtpu: 0.0.40
codegen_flags: <defaults>
</compile_context>

<pallas_src>
import functools

import jax
import jax.numpy as jnp
from jax.experimental import pallas as pl
from jax.experimental.pallas import tpu as pltpu

_LANE = 128
_MIN_TB = 16                              # bf16-packed sublane pair tile
_WEIGHT_VMEM_BUDGET = 40 * 1024 * 1024    # conservative for v7x's 64 MiB VMEM


def _round_up(n, m):
    return -(-n // m) * m


def _apply_activation(h, activation):
    if activation == "relu":
        return jnp.maximum(h, 0.0)
    if activation == "leaky_relu":
        return jnp.where(h > 0.0, h, 0.2 * h)
    if activation == "sigmoid":
        return jax.nn.sigmoid(h)
    if activation == "tanh":
        return jnp.tanh(h)
    raise NotImplementedError(f"Unsupported Activation Function {activation}")


def _mlp_kernel(x_ref, w1_ref, b1_ref, w2_ref, b2_ref, o_ref, acc_ref, *,
                activation):
    hk = pl.program_id(1)

    @pl.when(hk == 0)
    def _init():
        acc_ref[...] = jnp.zeros_like(acc_ref)

    # x arrives f32; cast to the matmul dtype in-register (VPU), not in the
    # wrapper (saves a separate HBM read+write pass over x).
    xb = x_ref[...].astype(w1_ref.dtype)
    h = jnp.dot(xb, w1_ref[...], preferred_element_type=jnp.float32)
    h = _apply_activation(h + b1_ref[...], activation)
    acc_ref[...] += jnp.dot(h.astype(w2_ref.dtype), w2_ref[...],
                            preferred_element_type=jnp.float32)

    @pl.when(hk == pl.num_programs(1) - 1)
    def _finish():
        o_ref[...] = (acc_ref[...] + b2_ref[...]).astype(o_ref.dtype)


def prepare_params(w1, b1, w2, b2, *, compute_dtype=jnp.bfloat16,
                   weight_vmem_budget=_WEIGHT_VMEM_BUDGET):
    """Pad/cast params once (outside the forward jit); pick the hidden block.

    Returns ((w1p, b1p, w2p, b2p), block_h).
    w1: [D_in, H], b1: [1, H] (or [H]), w2: [H, D_out], b2: [1, D_out] (or [D_out]).
    """
    d_in, hidden = w1.shape
    hidden2, d_out = w2.shape
    assert hidden == hidden2
    dp = _round_up(d_in, _LANE)
    hp = _round_up(hidden, _LANE)
    np_ = _round_up(d_out, _LANE)

    # Resident-weight footprint (single-buffered bf16 weights + f32 biases).
    resident_bytes = (dp * hp + hp * np_) * 2 + (hp + np_) * 4
    if resident_bytes <= weight_vmem_budget:
        block_h = hp                        # whole weights resident, 1 H step
    else:
        # Streaming H-slabs are double-buffered: ~2 * th * (dp + np_) bf16.
        th = weight_vmem_budget // (4 * (dp + np_) + 8)
        block_h = max(_LANE, (th // _LANE) * _LANE)
        hp = _round_up(hp, block_h)

    def pad2(a, rows, cols, dtype):
        a = jnp.asarray(a, dtype)
        return jnp.pad(a, ((0, rows - a.shape[0]), (0, cols - a.shape[1])))

    w1p = pad2(w1, dp, hp, compute_dtype)
    b1p = pad2(jnp.reshape(b1, (1, hidden)), 1, hp, jnp.float32)
    w2p = pad2(w2, hp, np_, compute_dtype)
    b2p = pad2(jnp.reshape(b2, (1, d_out)), 1, np_, jnp.float32)
    return (w1p, b1p, w2p, b2p), block_h


@functools.partial(
    jax.jit,
    static_argnames=("d_out", "block_h", "block_b", "activation", "out_dtype"))
def nlayer_mlp_forward(x, w1p, b1p, w2p, b2p, *, d_out, block_h,
                       block_b=256, activation="relu", out_dtype=jnp.float32):
    """Fused 2-layer MLP forward: act(x @ w1 + b1) @ w2 + b2.

    x: [B, D_in] float32 (cast to bf16 inside the kernel).
    w*p/b*p: pre-padded / pre-cast params from prepare_params().
    Returns [B, d_out] in out_dtype.
    """
    B, d_in = x.shape
    dp, hp = w1p.shape
    hp2, np_ = w2p.shape
    assert hp == hp2 and hp % block_h == 0 and d_in <= dp and d_out <= np_
    n_h = hp // block_h

    # Adaptive batch tile: at most ~one wasted tile, multiple of 16, and
    # >= 2 tiles when the batch allows it so both v7x TensorCores run.
    n_bt = -(-B // block_b)
    if n_bt == 1 and B >= 2 * _MIN_TB:
        n_bt = 2
    tb = min(block_b, _round_up(-(-B // n_bt), _MIN_TB))
    bp = _round_up(B, tb)

    xp = x if (bp == B and dp == d_in) else jnp.pad(
        x, ((0, bp - B), (0, dp - d_in)))

    grid = (bp // tb, n_h)

    # Single-buffer blocks whose index_map is constant over the whole grid
    # (resident data): double-buffering them would only double VMEM use.
    resident = pl.Buffered(1)
    w_mode = resident if n_h == 1 else None

    def spec(shape, idx, mode=None):
        if mode is None:
            return pl.BlockSpec(shape, idx)
        return pl.BlockSpec(shape, idx, pipeline_mode=mode)

    in_specs = [
        pl.BlockSpec((tb, dp), lambda i, k: (i, 0)),        # x (resident over k)
        spec((dp, block_h), lambda i, k: (0, k), w_mode),   # w1 H-slab
        spec((1, block_h), lambda i, k: (0, k), w_mode),    # b1 H-slab
        spec((block_h, np_), lambda i, k: (k, 0), w_mode),  # w2 H-slab
        spec((1, np_), lambda i, k: (0, 0), resident),      # b2 (always resident)
    ]
    out_specs = pl.BlockSpec((tb, np_), lambda i, k: (i, 0))

    # Explicit VMEM budget (scoped defaults are only 16-32 MiB): weight slabs
    # (x1 if resident, x2 if streamed) + double-buffered x/out tiles + f32
    # accumulator + hidden temp, with 2x headroom, capped at 128 MiB.
    out_isz = jnp.dtype(out_dtype).itemsize
    w_bufs = 1 if n_h == 1 else 2
    need = (w_bufs * ((dp * block_h + block_h * np_) * 2 + block_h * 4)
            + np_ * 4
            + 2 * tb * dp * 4
            + 2 * tb * np_ * out_isz
            + tb * np_ * 4
            + tb * block_h * 4)
    vmem_limit = int(min(128 * 1024 * 1024, max(2 * need, 16 * 1024 * 1024)))

    cost = pl.CostEstimate(
        flops=2 * B * d_in * hp + 2 * B * hp * d_out,
        transcendentals=(B * hp) if activation in ("sigmoid", "tanh") else 0,
        bytes_accessed=(x.size * x.dtype.itemsize
                        + w1p.size * w1p.dtype.itemsize
                        + b1p.size * b1p.dtype.itemsize
                        + w2p.size * w2p.dtype.itemsize
                        + b2p.size * b2p.dtype.itemsize
                        + B * d_out * out_isz),
    )

    out_padded = pl.pallas_call(
        functools.partial(_mlp_kernel, activation=activation),
        out_shape=jax.ShapeDtypeStruct((bp, np_), out_dtype),
        grid=grid,
        in_specs=in_specs,
        out_specs=out_specs,
        scratch_shapes=[pltpu.VMEM((tb, np_), jnp.float32)],
        compiler_params=pltpu.CompilerParams(
            dimension_semantics=("parallel", "arbitrary"),
            vmem_limit_bytes=vmem_limit,
        ),
        cost_estimate=cost,
    )(xp, w1p, b1p, w2p, b2p)

    if bp == B and np_ == d_out:
        return out_padded
    return out_padded[:B, :d_out]


def init_params(key, input_dim, output_dim):
    """Deterministic init mimicking nn.Linear (uniform +-1/sqrt(fan_in))."""
    hidden = input_dim * 4
    k1, k2, k3, k4 = jax.random.split(key, 4)
    lim1 = 1.0 / (input_dim ** 0.5)
    lim2 = 1.0 / (hidden ** 0.5)
    # stored as [in, out] (transpose of PyTorch's [out, in])
    w1 = jax.random.uniform(k1, (input_dim, hidden), jnp.float32, -lim1, lim1)
    b1 = jax.random.uniform(k2, (1, hidden), jnp.float32, -lim1, lim1)
    w2 = jax.random.uniform(k3, (hidden, output_dim), jnp.float32, -lim2, lim2)
    b2 = jax.random.uniform(k4, (1, output_dim), jnp.float32, -lim2, lim2)
    return w1, b1, w2, b2


if __name__ == "__main__":
    # NLayerMLP(input_dim=32, output_dim=16, back_steps=4)
    # (default path: no inner_blocks, relu)
    input_dim = 32
    output_dim = 16
    batch = 8

    key = jax.random.PRNGKey(0)
    kx, kp = jax.random.split(key)
    x = jax.random.normal(kx, (batch, input_dim), jnp.float32)
    w1, b1, w2, b2 = init_params(kp, input_dim, output_dim)

    (w1p, b1p, w2p, b2p), block_h = prepare_params(w1, b1, w2, b2)
    out = nlayer_mlp_forward(x, w1p, b1p, w2p, b2p,
                             d_out=output_dim, block_h=block_h)
    jax.block_until_ready(out)
    assert out.shape == (batch, output_dim)

    # Reference 1: same bf16-operand / f32-accumulate recipe as the kernel.
    h_q = jnp.maximum(
        jnp.dot(x.astype(jnp.bfloat16), w1.astype(jnp.bfloat16),
                preferred_element_type=jnp.float32) + b1, 0.0)
    ref_q = jnp.dot(h_q.astype(jnp.bfloat16), w2.astype(jnp.bfloat16),
                    preferred_element_type=jnp.float32) + b2
    assert jnp.allclose(out, ref_q, atol=1e-4, rtol=1e-4)

    # Reference 2: pure f32 math, loose tolerance (bf16 operand rounding).
    ref_f32 = jnp.maximum(x @ w1 + b1, 0.0) @ w2 + b2
    assert jnp.allclose(out, ref_f32, atol=5e-2, rtol=5e-2)

    print("KERNEL_OK")
</pallas_src>

<mosaic_0001>
module attributes {stable_mosaic.version = 11 : i64} {
  func.func @_mlp_kernel(%arg0: i32, %arg1: i32, %arg2: memref<16x128xf32, #tpu.memory_space<vmem>>, %arg3: memref<128x128xbf16, #tpu.memory_space<vmem>>, %arg4: memref<1x128xf32, #tpu.memory_space<vmem>>, %arg5: memref<128x128xbf16, #tpu.memory_space<vmem>>, %arg6: memref<1x128xf32, #tpu.memory_space<vmem>>, %arg7: memref<16x128xf32, #tpu.memory_space<vmem>>, %arg8: memref<16x128xf32, #tpu.memory_space<vmem>>) attributes {dimension_semantics = [#tpu.dimension_semantics<parallel>, #tpu.dimension_semantics<arbitrary>], iteration_bounds = array<i64: 1, 1>, scalar_prefetch = 0 : i64, scratch_operands = 1 : i64, tpu.core_type = #tpu.core_type<tc>, window_params = [{transform_indices = @transform_0, window_bounds = array<i64: 16, 128>}, {pipeline_mode = #tpu.pipeline_mode<synchronous>, transform_indices = @transform_1, window_bounds = array<i64: 128, 128>}, {pipeline_mode = #tpu.pipeline_mode<synchronous>, transform_indices = @transform_2, window_bounds = array<i64: 1, 128>}, {pipeline_mode = #tpu.pipeline_mode<synchronous>, transform_indices = @transform_3, window_bounds = array<i64: 128, 128>}, {pipeline_mode = #tpu.pipeline_mode<synchronous>, transform_indices = @transform_4, window_bounds = array<i64: 1, 128>}, {transform_indices = @transform_5, window_bounds = array<i64: 16, 128>}]} {
    %c0_i32 = arith.constant 0 : i32
    %0 = arith.cmpi eq, %arg1, %c0_i32 : i32
    %1 = arith.extui %0 : i1 to i32
    %c0_i32_0 = arith.constant 0 : i32
    %2 = arith.cmpi ne, %1, %c0_i32_0 : i32
    scf.if %2 {
      %cst_16 = arith.constant 0.000000e+00 : f32
      %21 = vector.broadcast %cst_16 : f32 to vector<16x128xf32>
      %c0_17 = arith.constant 0 : index
      %c0_18 = arith.constant 0 : index
      %22 = vector.load %arg8[%c0_17, %c0_18] : memref<16x128xf32, #tpu.memory_space<vmem>>, vector<16x128xf32>
      tpu.vector_store %arg8[%c0_17, %c0_18], %21 {strides = array<i32>} : memref<16x128xf32, #tpu.memory_space<vmem>>, vector<16x128xf32>,
    } else {
    }
    %c0 = arith.constant 0 : index
    %c0_1 = arith.constant 0 : index
    %3 = vector.load %arg2[%c0, %c0_1] : memref<16x128xf32, #tpu.memory_space<vmem>>, vector<16x128xf32>
    %4 = arith.truncf %3 : vector<16x128xf32> to vector<16x128xbf16>
    %c0_2 = arith.constant 0 : index
    %c0_3 = arith.constant 0 : index
    %5 = vector.load %arg3[%c0_2, %c0_3] : memref<128x128xbf16, #tpu.memory_space<vmem>>, vector<128x128xbf16>
    %cst = arith.constant dense<0.000000e+00> : vector<16x128xf32>
    %6 = tpu.matmul %4, %5, %cst {dimension_numbers = #tpu.dot_dimension_numbers<[1], [0], [0], [1], [0, 0, 1, 1], [], []>} : vector<16x128xbf16>, vector<128x128xbf16>, vector<16x128xf32> -> vector<16x128xf32>
    %c0_4 = arith.constant 0 : index
    %c0_5 = arith.constant 0 : index
    %7 = vector.load %arg4[%c0_4, %c0_5] : memref<1x128xf32, #tpu.memory_space<vmem>>, vector<1x128xf32>
    %8 = vector.broadcast %7 : vector<1x128xf32> to vector<16x128xf32>
    %9 = arith.addf %6, %8 : vector<16x128xf32>
    %cst_6 = arith.constant 0.000000e+00 : f32
    %10 = vector.broadcast %cst_6 : f32 to vector<16x128xf32>
    %11 = arith.maximumf %9, %10 : vector<16x128xf32>
    %c0_7 = arith.constant 0 : index
    %c0_8 = arith.constant 0 : index
    %12 = vector.load %arg8[%c0_7, %c0_8] : memref<16x128xf32, #tpu.memory_space<vmem>>, vector<16x128xf32>
    %13 = arith.truncf %11 : vector<16x128xf32> to vector<16x128xbf16>
    %c0_9 = arith.constant 0 : index
    %c0_10 = arith.constant 0 : index
    %14 = vector.load %arg5[%c0_9, %c0_10] : memref<128x128xbf16, #tpu.memory_space<vmem>>, vector<128x128xbf16>
    %cst_11 = arith.constant dense<0.000000e+00> : vector<16x128xf32>
    %15 = tpu.matmul %13, %14, %cst_11 {dimension_numbers = #tpu.dot_dimension_numbers<[1], [0], [0], [1], [0, 0, 1, 1], [], []>} : vector<16x128xbf16>, vector<128x128xbf16>, vector<16x128xf32> -> vector<16x128xf32>
    %16 = arith.addf %12, %15 : vector<16x128xf32>
    %c0_12 = arith.constant 0 : index
    %c0_13 = arith.constant 0 : index
    %17 = vector.load %arg8[%c0_12, %c0_13] : memref<16x128xf32, #tpu.memory_space<vmem>>, vector<16x128xf32>
    tpu.vector_store %arg8[%c0_12, %c0_13], %16 {strides = array<i32>} : memref<16x128xf32, #tpu.memory_space<vmem>>, vector<16x128xf32>,
    %c0_i32_14 = arith.constant 0 : i32
    %18 = arith.cmpi eq, %arg1, %c0_i32_14 : i32
    %19 = arith.extui %18 : i1 to i32
    %c0_i32_15 = arith.constant 0 : i32
    %20 = arith.cmpi ne, %19, %c0_i32_15 : i32
    scf.if %20 {
      %c0_16 = arith.constant 0 : index
      %c0_17 = arith.constant 0 : index
      %21 = vector.load %arg8[%c0_16, %c0_17] : memref<16x128xf32, #tpu.memory_space<vmem>>, vector<16x128xf32>
      %c0_18 = arith.constant 0 : index
      %c0_19 = arith.constant 0 : index
      %22 = vector.load %arg6[%c0_18, %c0_19] : memref<1x128xf32, #tpu.memory_space<vmem>>, vector<1x128xf32>
      %23 = vector.broadcast %22 : vector<1x128xf32> to vector<16x128xf32>
      %24 = arith.addf %21, %23 : vector<16x128xf32>
      %c0_20 = arith.constant 0 : index
      %c0_21 = arith.constant 0 : index
      %25 = vector.load %arg7[%c0_20, %c0_21] : memref<16x128xf32, #tpu.memory_space<vmem>>, vector<16x128xf32>
      tpu.vector_store %arg7[%c0_20, %c0_21], %24 {strides = array<i32>} : memref<16x128xf32, #tpu.memory_space<vmem>>, vector<16x128xf32>,
    } else {
    }
    return
  }
  func.func @transform_0(%arg0: i32, %arg1: i32) -> (i32, i32) {
    %c0_i32 = arith.constant 0 : i32
    %c0_i32_0 = arith.constant 0 : i32
    return %arg0, %c0_i32 : i32, i32
  }
  func.func @transform_1(%arg0: i32, %arg1: i32) -> (i32, i32) {
    %c0_i32 = arith.constant 0 : i32
    %c0_i32_0 = arith.constant 0 : i32
    return %c0_i32, %arg1 : i32, i32
  }
  func.func @transform_2(%arg0: i32, %arg1: i32) -> (i32, i32) {
    %c0_i32 = arith.constant 0 : i32
    %c0_i32_0 = arith.constant 0 : i32
    return %c0_i32, %arg1 : i32, i32
  }
  func.func @transform_3(%arg0: i32, %arg1: i32) -> (i32, i32) {
    %c0_i32 = arith.constant 0 : i32
    %c0_i32_0 = arith.constant 0 : i32
    return %arg1, %c0_i32 : i32, i32
  }
  func.func @transform_4(%arg0: i32, %arg1: i32) -> (i32, i32) {
    %c0_i32 = arith.constant 0 : i32
    %c0_i32_0 = arith.constant 0 : i32
    %c0_i32_1 = arith.constant 0 : i32
    return %c0_i32, %c0_i32_0 : i32, i32
  }
  func.func @transform_5(%arg0: i32, %arg1: i32) -> (i32, i32) {
    %c0_i32 = arith.constant 0 : i32
    %c0_i32_0 = arith.constant 0 : i32
    return %arg0, %c0_i32 : i32, i32
  }
}

</mosaic_0001>

<llo_original>
// kernel: nlayer_mlp_forward.1
$region0: #{nlayer_mlp_forward.1}
  #allocation0 [shape = 'u32[]', space=smem, size = 0x4, offset = 0x4, fixed_abs, tag = 'smem constant byte address 0x4 - core index']
  #allocation1 [shape = 'u32[144,128]{1,0:T(1,128)}', space=vmem, size = 0x12000, scoped, tag = 'internal scratch']
  #allocation2 [shape = 'f32[16,128]{1,0:T(8,128)}', space=vmem, size = 0x2000, scoped, tag = 'scratch operand']
  %s0 = inlined_call_operand.vmem [shape: f32[16,128], index: 0, kind: input, shape index: {}]
  %s1 = inlined_call_operand.hbm [shape: bf16[128,128], index: 1, kind: input, shape index: {}]
  %s2 = inlined_call_operand.vmem [shape: f32[1,128], index: 2, kind: input, shape index: {}]
  %s3 = inlined_call_operand.hbm [shape: bf16[128,128], index: 3, kind: input, shape index: {}]
  %s4 = inlined_call_operand.vmem [shape: f32[1,128], index: 4, kind: input, shape index: {}]
  %s5 = inlined_call_operand.vmem [shape: f32[16,128], index: 5, kind: output, shape index: {}]
  %s6 = sld [smem:[#allocation0]]
  $region46: #{nlayer_mlp_forward.1} parent=0
    _
  %s8 = ssub.s32 1, %s6
  %s9 = scalar_select 0, %s8, %s6
  $region1: #{nlayer_mlp_forward.1} parent=0
    #allocation3 [shape = 'u8[32768]{0}', space=vmem, size = 0x8000, scoped, tag = 'input window, operand 1, single buffered']
    #allocation4 [shape = 's32[1]{0}', space=sflag, size = 0x4, scoped, tag = 'scoped memory for nlayer_mlp_forward.1']
    #allocation5 [shape = 'u8[32768]{0}', space=vmem, size = 0x8000, scoped, tag = 'input window, operand 3, single buffered']
    #allocation6 [shape = 's32[1]{0}', space=sflag, size = 0x4, scoped, tag = 'scoped memory for nlayer_mlp_forward.1']
    %10 = vsyncpa [#allocation4], 0
    %11 = vsyncpa [#allocation6], 0
    // Predicated region
    $region2: #{nlayer_mlp_forward.1} parent=1 // pred_check
      _
    $region3: #{nlayer_mlp_forward.1} parent=1 // pred_check_branch
      %13 = sbr.rel (0) target = $region5
    $region4: #{nlayer_mlp_forward.1} parent=1 // pred_region
      _
    $region5: #{nlayer_mlp_forward.1} parent=1 // pred_fallthru
      _
    // Predicated region
    $region6: #{nlayer_mlp_forward.1} parent=1 // pred_check
      _
    $region7: #{nlayer_mlp_forward.1} parent=1 // pred_check_branch
      %15 = sbr.rel (0) target = $region9
    $region8: #{nlayer_mlp_forward.1} parent=1 // pred_region
      %s17 = ssub.s32 1024, 1024
      %18 = vsyncadd [#allocation4], %s17
      %s19 = sshll.u32 [#allocation3], 4
      %s20 = int_to_ptr.vmem [resolvable:$true] %s19
      %25 = dma.hbm_to_vmem [thread:$0]  %s1, 1024, %s20, [#allocation4], 64, 64, 4
    $region9: #{nlayer_mlp_forward.1} parent=1 // pred_fallthru
      _
    // Predicated region
    $region10: #{nlayer_mlp_forward.1} parent=1 // pred_check
      _
    $region11: #{nlayer_mlp_forward.1} parent=1 // pred_check_branch
      %27 = sbr.rel (0) target = $region13
    $region12: #{nlayer_mlp_forward.1} parent=1 // pred_region
      _
    $region13: #{nlayer_mlp_forward.1} parent=1 // pred_fallthru
      _
    // Predicated region
    $region14: #{nlayer_mlp_forward.1} parent=1 // pred_check
      _
    $region15: #{nlayer_mlp_forward.1} parent=1 // pred_check_branch
      %29 = sbr.rel (0) target = $region17
    $region16: #{nlayer_mlp_forward.1} parent=1 // pred_region
      %s31 = ssub.s32 1024, 1024
      %32 = vsyncadd [#allocation6], %s31
      %s33 = sshll.u32 [#allocation5], 4
      %s34 = int_to_ptr.vmem [resolvable:$true] %s33
      %39 = dma.hbm_to_vmem [thread:$0]  %s3, 1024, %s34, [#allocation6], 64, 64, 4
    $region17: #{nlayer_mlp_forward.1} parent=1 // pred_fallthru
      _
    // Predicated region
    $region18: #{nlayer_mlp_forward.1} parent=1 // pred_check
      _
    $region19: #{nlayer_mlp_forward.1} parent=1 // pred_check_branch
      %41 = sbr.rel (0) target = $region21
    $region20: #{nlayer_mlp_forward.1} parent=1 // pred_region
      _
    $region21: #{nlayer_mlp_forward.1} parent=1 // pred_fallthru
      _
    // Predicated region
    $region22: #{nlayer_mlp_forward.1} parent=1 // pred_check
      _
    $region23: #{nlayer_mlp_forward.1} parent=1 // pred_check_branch
      %43 = sbr.rel (0) target = $region25
    $region24: #{nlayer_mlp_forward.1} parent=1 // pred_region
      %44 = dma.done [#allocation4], 1024
    $region25: #{nlayer_mlp_forward.1} parent=1 // pred_fallthru
      _
    // Predicated region
    $region26: #{nlayer_mlp_forward.1} parent=1 // pred_check
      _
    $region27: #{nlayer_mlp_forward.1} parent=1 // pred_check_branch
      %46 = sbr.rel (0) target = $region29
    $region28: #{nlayer_mlp_forward.1} parent=1 // pred_region
      %47 = dma.done [#allocation6], 1024
    $region29: #{nlayer_mlp_forward.1} parent=1 // pred_fallthru
      _
    %p49 = scmp.eq.s32.totalorder 0, 0
    // Predicated region
    $region30: #{nlayer_mlp_forward.1} parent=1 // pred_check
      %p50 = pneg %p49
    $region31: #{nlayer_mlp_forward.1} parent=1 // pred_check_branch
      %52 = sbr.rel (%p50) target = $region33
    $region32: #{nlayer_mlp_forward.1} parent=1 // pred_region
      %53 = vst [vmem:[#allocation2] sm:$0xff] 0.0
      %54 = vst [vmem:[#allocation2 + $0x8] sm:$0xff] 0.0
    $region33: #{nlayer_mlp_forward.1} parent=1 // pred_fallthru
      _
    %v55 = vld [vmem:[%s0] sm:$0xff]
    %v56 = vld [vmem:[%s0 + $0x8] sm:$0xff]
    %v57 = vpack.c.bf16 %v56, %v55
    %v58 = vld [vmem:[#allocation3] sm:$0xf]
    %v59 = vld [vmem:[#allocation3 + $0x4] sm:$0xf]
    %v60 = vld [vmem:[#allocation3 + $0x8] sm:$0xf]
    %v61 = vld [vmem:[#allocation3 + $0xc] sm:$0xf]
    %v62 = vld [vmem:[#allocation3 + $0x10] sm:$0xf]
    %v63 = vld [vmem:[#allocation3 + $0x14] sm:$0xf]
    %v64 = vld [vmem:[#allocation3 + $0x18] sm:$0xf]
    %v65 = vld [vmem:[#allocation3 + $0x1c] sm:$0xf]
    %v66 = vld [vmem:[#allocation3 + $0x20] sm:$0xf]
    %v67 = vld [vmem:[#allocation3 + $0x24] sm:$0xf]
    %v68 = vld [vmem:[#allocation3 + $0x28] sm:$0xf]
    %v69 = vld [vmem:[#allocation3 + $0x2c] sm:$0xf]
    %v70 = vld [vmem:[#allocation3 + $0x30] sm:$0xf]
    %v71 = vld [vmem:[#allocation3 + $0x34] sm:$0xf]
    %v72 = vld [vmem:[#allocation3 + $0x38] sm:$0xf]
    %v73 = vld [vmem:[#allocation3 + $0x3c] sm:$0xf]
    %v74 = vld [vmem:[%s2] sm:$0x1]
    %v76 = vlaneseq
    %v77 = vshrl.u32 %v76, 7
    %v78 = vsub.s32 0, %v77
    %v79 = vrot.slane %v74, %v78
    %v97 = vunpack.c.l.b16 %v58
    %v98 = vunpack.c.l.b16 %v59
    %v99 = vunpack.c.l.b16 %v60
    %v100 = vunpack.c.l.b16 %v61
    %v101 = vunpack.c.l.b16 %v62
    %v102 = vunpack.c.l.b16 %v63
    %v103 = vunpack.c.l.b16 %v64
    %v104 = vunpack.c.l.b16 %v65
    %v105 = vunpack.c.l.b16 %v66
    %v106 = vunpack.c.l.b16 %v67
    %v107 = vunpack.c.l.b16 %v68
    %v108 = vunpack.c.l.b16 %v69
    %v109 = vunpack.c.l.b16 %v70
    %v110 = vunpack.c.l.b16 %v71
    %v111 = vunpack.c.l.b16 %v72
    %v112 = vunpack.c.l.b16 %v73
    %v113 = vpack.c.b16 %v98, %v97
    %v114 = vpack.c.b16 %v100, %v99
    %v115 = vpack.c.b16 %v102, %v101
    %v116 = vpack.c.b16 %v104, %v103
    %v117 = vpack.c.b16 %v106, %v105
    %v118 = vpack.c.b16 %v108, %v107
    %v119 = vpack.c.b16 %v110, %v109
    %v120 = vpack.c.b16 %v112, %v111
    %129 = vmatprep.subr.bf16.mxu0 0
    %130 = vmatpush1.bf16.msra.mxu0 %v113
    %131 = vmatprep.subr.bf16.mxu0 0
    %132 = vmatpush1.bf16.msra.mxu0 %v114
    %133 = vmatprep.subr.bf16.mxu0 0
    %134 = vmatpush1.bf16.msra.mxu0 %v115
    %135 = vmatprep.subr.bf16.mxu0 0
    %136 = vmatpush1.bf16.msra.mxu0 %v116
    %137 = vmatprep.subr.bf16.mxu0 0
    %138 = vmatpush1.bf16.msra.mxu0 %v117
    %139 = vmatprep.subr.bf16.mxu0 0
    %140 = vmatpush1.bf16.msra.mxu0 %v118
    %141 = vmatprep.subr.bf16.mxu0 0
    %142 = vmatpush1.bf16.msra.mxu0 %v119
    %143 = vmatprep.subr.bf16.mxu0 0
    %144 = vmatpush1.bf16.msra.mxu0 %v120
    %145 = vmatprep.subr.bf16.mxu0 0
    %146 = vmatpush1.bf16.msra.mxu0 0
    %147 = vmatprep.subr.bf16.mxu0 0
    %148 = vmatpush1.bf16.msra.mxu0 0
    %149 = vmatprep.subr.bf16.mxu0 0
    %150 = vmatpush1.bf16.msra.mxu0 0
    %151 = vmatprep.subr.bf16.mxu0 0
    %152 = vmatpush1.bf16.msra.mxu0 0
    %153 = vmatprep.subr.bf16.mxu0 0
    %154 = vmatpush1.bf16.msra.mxu0 0
    %155 = vmatprep.subr.bf16.mxu0 0
    %156 = vmatpush1.bf16.msra.mxu0 0
    %157 = vmatprep.subr.bf16.mxu0 0
    %158 = vmatpush1.bf16.msra.mxu0 0
    %159 = vmatprep.subr.bf16.mxu0 0
    %160 = vmatpush1.bf16.msra.mxu0 0
    %161 = vmatprep.mubr.bf16.mxu0 0
    %162 = vmatmul.mubr.bf16.gmra.mrb[0].mxu0 %v57
    %v163 = vpop.f32.mrb[0].mxu0
    %v164 = vadd.f32 %v79, %v163
    %v165 = vpop.f32.mrb[0].mxu0
    %v166 = vpop.f32.mrb[0].mxu0
    %v167 = vadd.f32 %v79, %v166
    %v168 = vpop.f32.mrb[0].mxu0
    %169 = vdwg.mxu0
    %v170 = vmax.f32 %v164, 0.0
    %v171 = vmax.f32 %v167, 0.0
    %v172 = vld [vmem:[#allocation2] sm:$0xff]
    %v173 = vld [vmem:[#allocation2 + $0x8] sm:$0xff]
    %v174 = vpack.c.bf16 %v171, %v170
    %v175 = vld [vmem:[#allocation5] sm:$0xf]
    %v176 = vld [vmem:[#allocation5 + $0x4] sm:$0xf]
    %v177 = vld [vmem:[#allocation5 + $0x8] sm:$0xf]
    %v178 = vld [vmem:[#allocation5 + $0xc] sm:$0xf]
    %v179 = vld [vmem:[#allocation5 + $0x10] sm:$0xf]
    %v180 = vld [vmem:[#allocation5 + $0x14] sm:$0xf]
    %v181 = vld [vmem:[#allocation5 + $0x18] sm:$0xf]
    %v182 = vld [vmem:[#allocation5 + $0x1c] sm:$0xf]
    %v183 = vld [vmem:[#allocation5 + $0x20] sm:$0xf]
    %v184 = vld [vmem:[#allocation5 + $0x24] sm:$0xf]
    %v185 = vld [vmem:[#allocation5 + $0x28] sm:$0xf]
    %v186 = vld [vmem:[#allocation5 + $0x2c] sm:$0xf]
    %v187 = vld [vmem:[#allocation5 + $0x30] sm:$0xf]
    %v188 = vld [vmem:[#allocation5 + $0x34] sm:$0xf]
    %v189 = vld [vmem:[#allocation5 + $0x38] sm:$0xf]
    %v190 = vld [vmem:[#allocation5 + $0x3c] sm:$0xf]
    %v207 = vunpack.c.l.b16 %v175
    %v208 = vunpack.c.l.b16 %v176
    %v209 = vunpack.c.l.b16 %v177
    %v210 = vunpack.c.l.b16 %v178
    %v211 = vunpack.c.l.b16 %v179
    %v212 = vunpack.c.l.b16 %v180
    %v213 = vunpack.c.l.b16 %v181
    %v214 = vunpack.c.l.b16 %v182
    %v215 = vunpack.c.l.b16 %v183
    %v216 = vunpack.c.l.b16 %v184
    %v217 = vunpack.c.l.b16 %v185
    %v218 = vunpack.c.l.b16 %v186
    %v219 = vunpack.c.l.b16 %v187
    %v220 = vunpack.c.l.b16 %v188
    %v221 = vunpack.c.l.b16 %v189
    %v222 = vunpack.c.l.b16 %v190
    %v223 = vpack.c.b16 %v208, %v207
    %v224 = vpack.c.b16 %v210, %v209
    %v225 = vpack.c.b16 %v212, %v211
    %v226 = vpack.c.b16 %v214, %v213
    %v227 = vpack.c.b16 %v216, %v215
    %v228 = vpack.c.b16 %v218, %v217
    %v229 = vpack.c.b16 %v220, %v219
    %v230 = vpack.c.b16 %v222, %v221
    %239 = vmatprep.subr.bf16.mxu0 0
    %240 = vmatpush1.bf16.msra.mxu0 %v223
    %241 = vmatprep.subr.bf16.mxu0 0
    %242 = vmatpush1.bf16.msra.mxu0 %v224
    %243 = vmatprep.subr.bf16.mxu0 0
    %244 = vmatpush1.bf16.msra.mxu0 %v225
    %245 = vmatprep.subr.bf16.mxu0 0
    %246 = vmatpush1.bf16.msra.mxu0 %v226
    %247 = vmatprep.subr.bf16.mxu0 0
    %248 = vmatpush1.bf16.msra.mxu0 %v227
    %249 = vmatprep.subr.bf16.mxu0 0
    %250 = vmatpush1.bf16.msra.mxu0 %v228
    %251 = vmatprep.subr.bf16.mxu0 0
    %252 = vmatpush1.bf16.msra.mxu0 %v229
    %253 = vmatprep.subr.bf16.mxu0 0
    %254 = vmatpush1.bf16.msra.mxu0 %v230
    %255 = vmatprep.subr.bf16.mxu0 0
    %256 = vmatpush1.bf16.msra.mxu0 0
    %257 = vmatprep.subr.bf16.mxu0 0
    %258 = vmatpush1.bf16.msra.mxu0 0
    %259 = vmatprep.subr.bf16.mxu0 0
    %260 = vmatpush1.bf16.msra.mxu0 0
    %261 = vmatprep.subr.bf16.mxu0 0
    %262 = vmatpush1.bf16.msra.mxu0 0
    %263 = vmatprep.subr.bf16.mxu0 0
    %264 = vmatpush1.bf16.msra.mxu0 0
    %265 = vmatprep.subr.bf16.mxu0 0
    %266 = vmatpush1.bf16.msra.mxu0 0
    %267 = vmatprep.subr.bf16.mxu0 0
    %268 = vmatpush1.bf16.msra.mxu0 0
    %269 = vmatprep.subr.bf16.mxu0 0
    %270 = vmatpush1.bf16.msra.mxu0 0
    %271 = vmatprep.mubr.bf16.mxu0 0
    %272 = vmatmul.mubr.bf16.gmra.mrb[0].mxu0 %v174
    %v273 = vpop.f32.mrb[0].mxu0
    %v274 = vadd.f32 0.0, %v273
    %v275 = vpop.f32.mrb[0].mxu0
    %v276 = vpop.f32.mrb[0].mxu0
    %v277 = vadd.f32 0.0, %v276
    %v278 = vpop.f32.mrb[0].mxu0
    %279 = vdwg.mxu0
    %v280 = vadd.f32 %v172, %v274
    %v281 = vadd.f32 %v173, %v277
    %282 = vst [vmem:[#allocation2] sm:$0xff] %v280
    %283 = vst [vmem:[#allocation2 + $0x8] sm:$0xff] %v281
    // Predicated region
    $region34: #{nlayer_mlp_forward.1} parent=1 // pred_check
      %p284 = pneg %p49
    $region35: #{nlayer_mlp_forward.1} parent=1 // pred_check_branch
      %286 = sbr.rel (%p284) target = $region37
    $region36: #{nlayer_mlp_forward.1} parent=1 // pred_region
      %v287 = vld [vmem:[#allocation2] sm:$0xff]
      %v288 = vld [vmem:[#allocation2 + $0x8] sm:$0xff]
      %v289 = vld [vmem:[%s4] sm:$0x1]
      %v291 = vlaneseq
      %v292 = vshrl.u32 %v291, 7
      %v293 = vsub.s32 0, %v292
      %v294 = vrot.slane %v289, %v293
      %v296 = vadd.f32 %v287, %v294
      %v297 = vadd.f32 %v288, %v294
      %298 = vst [vmem:[%s5] sm:$0xff] %v296
      %299 = vst [vmem:[%s5 + $0x8] sm:$0xff] %v297
    $region37: #{nlayer_mlp_forward.1} parent=1 // pred_fallthru
      _
    // Predicated region
    $region38: #{nlayer_mlp_forward.1} parent=1 // pred_check
      _
    $region39: #{nlayer_mlp_forward.1} parent=1 // pred_check_branch
      %301 = sbr.rel (0) target = $region41
    $region40: #{nlayer_mlp_forward.1} parent=1 // pred_region
      _
    $region41: #{nlayer_mlp_forward.1} parent=1 // pred_fallthru
      _
    // Predicated region
    $region42: #{nlayer_mlp_forward.1} parent=1 // pred_check
      _
    $region43: #{nlayer_mlp_forward.1} parent=1 // pred_check_branch
      %303 = sbr.rel (0) target = $region45
    $region44: #{nlayer_mlp_forward.1} parent=1 // pred_region
      _
    $region45: #{nlayer_mlp_forward.1} parent=1 // pred_fallthru
      _
    %304 = vsyncpa [#allocation4], 1
    %305 = vsyncpa [#allocation6], 1

</llo_original>
